<compile_context>
chip_gen: v7x
topology: tpu7x:2x2x1
jax: 0.10.0
libtpu: 0.0.40
codegen_flags: <defaults>
</compile_context>

<pallas_src>
import functools

import jax
import jax.numpy as jnp
from jax.experimental import pallas as pl
from jax.experimental.pallas import tpu as pltpu


def _deconv_kernel_vpu(x_ref, w_ref, b_ref, o_ref, *, cin):
    # x_ref: (Cin, tm)   activations, lanes = spatial (dense)
    # w_ref: (Nout, Cin) transposed weight, tiny & resident across grid steps
    # b_ref: (Nout, 1)   bias column (broadcast over lanes)
    # o_ref: (Nout, tm)  output tile, lanes = spatial (dense -> unmasked stores)
    w = w_ref[...].astype(jnp.float32)
    x = x_ref[...].astype(jnp.float32)
    acc = jnp.broadcast_to(b_ref[...].astype(jnp.float32), o_ref.shape)
    # Unrolled VPU contraction: Cin is tiny, an MXU pass would be ~empty (esp. on v5e).
    for ci in range(cin):
        acc = acc + w[:, ci:ci + 1] * x[ci:ci + 1, :]
    o_ref[...] = jnp.maximum(acc, 0.0).astype(o_ref.dtype)


def _deconv_kernel_mxu(x_ref, w_ref, b_ref, o_ref):
    acc = jnp.dot(w_ref[...], x_ref[...], preferred_element_type=jnp.float32)
    acc = acc + b_ref[...]
    o_ref[...] = jnp.maximum(acc, 0.0).astype(o_ref.dtype)


def upsampling_deconv_block(x_nchw, weight, bias, stride=2, *, tm=1024):
    """ConvTranspose2d(Cin, Cout, k=stride, stride=stride, padding=0) + ReLU.

    x_nchw: (N, Cin, H, W)
    weight: (Cin, Cout, s, s)   -- PyTorch ConvTranspose2d weight layout
    bias:   (Cout,)
    returns (N, Cout, H*s, W*s) float32 (NCHW, matching the PyTorch module)
    """
    N, Cin, H, W = x_nchw.shape
    Cin_w, Cout, s, s2 = weight.shape
    assert Cin == Cin_w and s == stride and s2 == stride
    Nout = Cout * s * s
    HW = H * W

    # Weight: (Cin, Cout, s, s) -> (Nout, Cin); row index = co*s*s + kh*s + kw.
    w_t = weight.reshape(Cin, Nout).T
    # Bias column matching that row order (each co value repeated s*s times).
    b_col = jnp.repeat(bias, s * s)[:, None]

    # Activations stay in native NCHW memory order: (N, Cin, H*W). No transpose.
    x3 = x_nchw.reshape(N, Cin, HW)

    # Lane-tile size: multiple of 128, capped by the (128-rounded) spatial extent.
    tm_eff = max(128, (min(tm, pl.cdiv(HW, 128) * 128) // 128) * 128)
    Mp = pl.cdiv(HW, tm_eff) * tm_eff
    if Mp != HW:
        # Ragged spatial axis: zero-pad lanes; padded columns are sliced off below.
        x3 = jnp.pad(x3, ((0, 0), (0, 0), (0, Mp - HW)))

    grid = (N, Mp // tm_eff)  # batch axis keeps grid >= 2 for v7x megacore sharding

    kernel = (functools.partial(_deconv_kernel_vpu, cin=Cin)
              if Cin <= 8 else _deconv_kernel_mxu)

    out3 = pl.pallas_call(
        kernel,
        out_shape=jax.ShapeDtypeStruct((N, Nout, Mp), x_nchw.dtype),
        grid=grid,
        in_specs=[
            # Activation tile: batch dim squeezed, kernel sees (Cin, tm_eff).
            pl.BlockSpec((None, Cin, tm_eff), lambda n, i: (n, 0, i)),
            # Weight / bias: constant index_map -> stay resident in VMEM, no re-DMA.
            pl.BlockSpec((Nout, Cin), lambda n, i: (0, 0)),
            pl.BlockSpec((Nout, 1), lambda n, i: (0, 0)),
        ],
        out_specs=pl.BlockSpec((None, Nout, tm_eff), lambda n, i: (n, 0, i)),
        compiler_params=pltpu.CompilerParams(
            dimension_semantics=("parallel", "parallel")),
    )(x3, w_t, b_col)

    # Pixel-shuffle back to NCHW upsampled output (only epilogue data movement left).
    out3 = out3[:, :, :HW]                              # drop lane padding
    out = out3.reshape(N, Cout, s, s, H, W)             # [n, co, kh, kw, h, w]
    out = jnp.transpose(out, (0, 1, 4, 2, 5, 3))        # (N, Cout, H, s, W, s)
    return out.reshape(N, Cout, H * s, W * s)


def reference_deconv(x_nchw, weight, bias, stride=2):
    """Pure-JAX reference for ConvTranspose2d(k=s, stride=s, p=0) + ReLU."""
    N, Cin, H, W = x_nchw.shape
    _, Cout, s, _ = weight.shape
    # (N, Cout, H, kh, W, kw); out[n,o,h*s+kh,w*s+kw] = sum_c x[n,c,h,w] * W[c,o,kh,kw]
    y = jnp.einsum('nchw,cokl->nohkwl', x_nchw, weight)
    y = y.reshape(N, Cout, H * s, W * s) + bias[None, :, None, None]
    return jnp.maximum(y, 0.0)


if __name__ == "__main__":
    key = jax.random.PRNGKey(0)
    k1, k2, k3 = jax.random.split(key, 3)

    N, Cin, H, W = 2, 4, 16, 16
    Cout, stride = 8, 2

    x = jax.random.normal(k1, (N, Cin, H, W), dtype=jnp.float32)
    # PyTorch-like init scale 1/sqrt(Cin*k*k).
    fan_in = Cin * stride * stride
    bound = 1.0 / (fan_in ** 0.5)
    weight = jax.random.uniform(k2, (Cin, Cout, stride, stride),
                                minval=-bound, maxval=bound, dtype=jnp.float32)
    bias = jax.random.uniform(k3, (Cout,), minval=-bound, maxval=bound,
                              dtype=jnp.float32)

    out = upsampling_deconv_block(x, weight, bias, stride=stride)
    out = jax.block_until_ready(out)

    ref = reference_deconv(x, weight, bias, stride=stride)
    assert out.shape == (N, Cout, H * stride, W * stride)
    assert jnp.allclose(out, ref, atol=1e-5, rtol=1e-5), "mismatch vs reference"

    print("KERNEL_OK")
</pallas_src>

<mosaic_0001>
module attributes {stable_mosaic.version = 11 : i64} {
  func.func @_deconv_kernel_vpu(%arg0: i32, %arg1: i32, %arg2: memref<1x4x256xf32, #tpu.memory_space<vmem>>, %arg3: memref<32x4xf32, #tpu.memory_space<vmem>>, %arg4: memref<32x1xf32, #tpu.memory_space<vmem>>, %arg5: memref<1x32x256xf32, #tpu.memory_space<vmem>>) attributes {dimension_semantics = [#tpu.dimension_semantics<parallel>, #tpu.dimension_semantics<parallel>], iteration_bounds = array<i64: 2, 1>, scalar_prefetch = 0 : i64, scratch_operands = 0 : i64, tpu.core_type = #tpu.core_type<tc>, window_params = [{transform_indices = @transform_0, window_bounds = array<i64: 1, 4, 256>}, {pipeline_mode = #tpu.pipeline_mode<synchronous>, transform_indices = @transform_1, window_bounds = array<i64: 32, 4>}, {pipeline_mode = #tpu.pipeline_mode<synchronous>, transform_indices = @transform_2, window_bounds = array<i64: 32, 1>}, {transform_indices = @transform_3, window_bounds = array<i64: 1, 32, 256>}]} {
    %c0 = arith.constant 0 : index
    %c0_0 = arith.constant 0 : index
    %0 = vector.load %arg3[%c0, %c0_0] : memref<32x4xf32, #tpu.memory_space<vmem>>, vector<32x4xf32>
    %c0_1 = arith.constant 0 : index
    %c0_2 = arith.constant 0 : index
    %c0_3 = arith.constant 0 : index
    %1 = vector.load %arg2[%c0_1, %c0_2, %c0_3] : memref<1x4x256xf32, #tpu.memory_space<vmem>>, vector<1x4x256xf32>
    %2 = vector.shape_cast %1 : vector<1x4x256xf32> to vector<4x256xf32>
    %c0_4 = arith.constant 0 : index
    %c0_5 = arith.constant 0 : index
    %3 = vector.load %arg4[%c0_4, %c0_5] : memref<32x1xf32, #tpu.memory_space<vmem>>, vector<32x1xf32>
    %4 = vector.shape_cast %3 : vector<32x1xf32> to vector<32x1xf32>
    %5 = vector.broadcast %4 : vector<32x1xf32> to vector<32x256xf32>
    %6 = vector.extract_strided_slice %0 {offsets = [0, 0], sizes = [32, 1], strides = [1, 1]} : vector<32x4xf32> to vector<32x1xf32>
    %7 = vector.extract_strided_slice %2 {offsets = [0, 0], sizes = [1, 256], strides = [1, 1]} : vector<4x256xf32> to vector<1x256xf32>
    %8 = vector.broadcast %6 : vector<32x1xf32> to vector<32x256xf32>
    %9 = vector.broadcast %7 : vector<1x256xf32> to vector<32x256xf32>
    %10 = arith.mulf %8, %9 : vector<32x256xf32>
    %11 = arith.addf %5, %10 : vector<32x256xf32>
    %12 = vector.extract_strided_slice %0 {offsets = [0, 1], sizes = [32, 1], strides = [1, 1]} : vector<32x4xf32> to vector<32x1xf32>
    %13 = vector.extract_strided_slice %2 {offsets = [1, 0], sizes = [1, 256], strides = [1, 1]} : vector<4x256xf32> to vector<1x256xf32>
    %14 = vector.broadcast %12 : vector<32x1xf32> to vector<32x256xf32>
    %15 = vector.broadcast %13 : vector<1x256xf32> to vector<32x256xf32>
    %16 = arith.mulf %14, %15 : vector<32x256xf32>
    %17 = arith.addf %11, %16 : vector<32x256xf32>
    %18 = vector.extract_strided_slice %0 {offsets = [0, 2], sizes = [32, 1], strides = [1, 1]} : vector<32x4xf32> to vector<32x1xf32>
    %19 = vector.extract_strided_slice %2 {offsets = [2, 0], sizes = [1, 256], strides = [1, 1]} : vector<4x256xf32> to vector<1x256xf32>
    %20 = vector.broadcast %18 : vector<32x1xf32> to vector<32x256xf32>
    %21 = vector.broadcast %19 : vector<1x256xf32> to vector<32x256xf32>
    %22 = arith.mulf %20, %21 : vector<32x256xf32>
    %23 = arith.addf %17, %22 : vector<32x256xf32>
    %24 = vector.extract_strided_slice %0 {offsets = [0, 3], sizes = [32, 1], strides = [1, 1]} : vector<32x4xf32> to vector<32x1xf32>
    %25 = vector.extract_strided_slice %2 {offsets = [3, 0], sizes = [1, 256], strides = [1, 1]} : vector<4x256xf32> to vector<1x256xf32>
    %26 = vector.broadcast %24 : vector<32x1xf32> to vector<32x256xf32>
    %27 = vector.broadcast %25 : vector<1x256xf32> to vector<32x256xf32>
    %28 = arith.mulf %26, %27 : vector<32x256xf32>
    %29 = arith.addf %23, %28 : vector<32x256xf32>
    %cst = arith.constant 0.000000e+00 : f32
    %30 = vector.broadcast %cst : f32 to vector<32x256xf32>
    %31 = arith.maximumf %29, %30 : vector<32x256xf32>
    %c0_6 = arith.constant 0 : index
    %c0_7 = arith.constant 0 : index
    %c0_8 = arith.constant 0 : index
    %32 = vector.load %arg5[%c0_6, %c0_7, %c0_8] : memref<1x32x256xf32, #tpu.memory_space<vmem>>, vector<1x32x256xf32>
    %33 = vector.shape_cast %32 : vector<1x32x256xf32> to vector<32x256xf32>
    %34 = vector.shape_cast %31 : vector<32x256xf32> to vector<1x32x256xf32>
    tpu.vector_store %arg5[%c0_6, %c0_7, %c0_8], %34 {strides = array<i32>} : memref<1x32x256xf32, #tpu.memory_space<vmem>>, vector<1x32x256xf32>,
    return
  }
  func.func @transform_0(%arg0: i32, %arg1: i32) -> (i32, i32, i32) {
    %c0_i32 = arith.constant 0 : i32
    %c0_i32_0 = arith.constant 0 : i32
    return %arg0, %c0_i32, %arg1 : i32, i32, i32
  }
  func.func @transform_1(%arg0: i32, %arg1: i32) -> (i32, i32) {
    %c0_i32 = arith.constant 0 : i32
    %c0_i32_0 = arith.constant 0 : i32
    %c0_i32_1 = arith.constant 0 : i32
    return %c0_i32, %c0_i32_0 : i32, i32
  }
  func.func @transform_2(%arg0: i32, %arg1: i32) -> (i32, i32) {
    %c0_i32 = arith.constant 0 : i32
    %c0_i32_0 = arith.constant 0 : i32
    %c0_i32_1 = arith.constant 0 : i32
    return %c0_i32, %c0_i32_0 : i32, i32
  }
  func.func @transform_3(%arg0: i32, %arg1: i32) -> (i32, i32, i32) {
    %c0_i32 = arith.constant 0 : i32
    %c0_i32_0 = arith.constant 0 : i32
    return %arg0, %c0_i32, %arg1 : i32, i32, i32
  }
}

</mosaic_0001>

<llo_original>
// kernel: tpu_custom_call.1
$region0: #{tpu_custom_call.1}
  #allocation0 [shape = 'u32[]', space=smem, size = 0x4, offset = 0x4, fixed_abs, tag = 'smem constant byte address 0x4 - core index']
  #allocation1 [shape = 'u32[144,128]{1,0:T(1,128)}', space=vmem, size = 0x12000, scoped, tag = 'internal scratch']
  %s0 = inlined_call_operand.vmem [shape: f32[2,4,256], index: 0, kind: input, shape index: {}]
  %s1 = inlined_call_operand.vmem [shape: f32[32,4], index: 1, kind: input, shape index: {}]
  %s2 = inlined_call_operand.vmem [shape: f32[32,1], index: 2, kind: input, shape index: {}]
  %s3 = inlined_call_operand.hbm [shape: f32[2,32,256], index: 3, kind: output, shape index: {}]
  %s4 = sld [smem:[#allocation0]]
  $region45: #{tpu_custom_call.1} parent=0
    _
  %s6 = ssub.s32 1, %s4
  %s7 = scalar_select 0, %s6, %s4
  $region1: #{tpu_custom_call.1} parent=0
    #allocation2 [shape = 'u8[65536]{0}', space=vmem, size = 0x10000, scoped, tag = 'output window, operand 0']
    #allocation3 [shape = 's32[2]{0}', space=sflag, size = 0x8, scoped, tag = 'scoped memory for tpu_custom_call.1']
    %8 = vsyncpa [#allocation3], 0
    %s9 = scalar_lea.sflag [#allocation3], 1
    %10 = vsyncpa %s9, 0
    loop: start=0, step=1, limit=4
    $region2: #{tpu_custom_call.1} parent=1 // loop_pre_header
      _
    $region3: #{tpu_custom_call.1} parent=1 // loop_header
      %s12 = sphi 0, %s16
      %p13 = scmp.ge.s32.totalorder %s12, 4
      %s19 = sphi 0, %s31
      %s20 = sphi 0, %s27
      %s21 = sphi 0, %s19
      %s22 = sphi 0, %s20
      %s23 = sphi 0, %s21
      %s24 = sphi 0, %s22
      %s36 = sphi 0, %s38
      %s39 = sphi 0, %s36
      %s40 = sphi 0, %s39
      %s56 = sphi 0, %s40
      %s60 = sphi 0, %s60
      %s62 = sphi 0, %s60
      %s63 = sphi 0, %s62
      %s77 = sphi 0, %s63
      %s81 = sphi 0, %s81
      %s83 = sphi 0, %s81
      %s84 = sphi 0, %s83
      %s98 = sphi 0, %s84
      %s106 = sphi 0, %s108
      %s109 = sphi 0, %s106
      %s110 = sphi 0, %s109
      %s126 = sphi 0, %s110
    $region4: #{tpu_custom_call.1} parent=1 // loop_header_branch
      %15 = sbr.rel (%p13) target = $region8
    $region5: #{tpu_custom_call.1} parent=1 // loop_body
      %s17 = ssub.s32 %s12, 1
      %s18 = ssub.s32 %s12, 2
      %s25 = sadd.s32 1, %s20
      %p26 = scmp.ge.s32.totalorder %s25, 1
      %s27 = scalar_select %p26, 0, %s25
      %s28 = sadd.s32 1, %s19
      %s29 = scalar_select %p26, %s28, %s19
      %p30 = scmp.ge.s32.totalorder %s29, 2
      %s31 = scalar_select %p30, 0, %s29
      %s32 = ssub.s32 %s19, %s31
      %s33 = ssub.s32 %s20, %s27
      %s34 = sor.u32 %s32, %s33
      %p35 = scmp.eq.s32.totalorder %s34, 0
      %s37 = sadd.s32 %s36, 1
      %s38 = scalar_select %p35, %s36, %s37
      %p41 = pneg %p35
      %p42 = scmp.eq.s32.totalorder %s12, 1
      %p43 = por %p41, %p42
      %p44 = scmp.ne.s32.totalorder %s36, %s39
      %p45 = scmp.eq.s32.totalorder %s12, 0
      %p46 = por %p44, %p45
      %p47 = scmp.ne.s32.totalorder %s36, %s39
      %p48 = scmp.eq.s32.totalorder %s17, 1
      %p49 = por %p47, %p48
      %p50 = scmp.ne.s32.totalorder %s39, %s40
      %p51 = scmp.eq.s32.totalorder %s17, 0
      %p52 = por %p50, %p51
      %p53 = scmp.ne.s32.totalorder %s39, %s40
      %p54 = scmp.eq.s32.totalorder %s18, 1
      %p55 = por %p53, %p54
      %p57 = scmp.ne.s32.totalorder %s40, %s56
      %p58 = scmp.eq.s32.totalorder %s18, 0
      %p59 = por %p57, %p58
      %s61 = sadd.s32 %s60, 1
      %p64 = scmp.eq.s32.totalorder %s12, 1
      %p65 = scmp.ne.s32.totalorder %s60, %s62
      %p66 = scmp.eq.s32.totalorder %s12, 0
      %p67 = por %p65, %p66
      %p68 = scmp.ne.s32.totalorder %s60, %s62
      %p69 = scmp.eq.s32.totalorder %s17, 1
      %p70 = por %p68, %p69
      %p71 = scmp.ne.s32.totalorder %s62, %s63
      %p72 = scmp.eq.s32.totalorder %s17, 0
      %p73 = por %p71, %p72
      %p74 = scmp.ne.s32.totalorder %s62, %s63
      %p75 = scmp.eq.s32.totalorder %s18, 1
      %p76 = por %p74, %p75
      %p78 = scmp.ne.s32.totalorder %s63, %s77
      %p79 = scmp.eq.s32.totalorder %s18, 0
      %p80 = por %p78, %p79
      %s82 = sadd.s32 %s81, 1
      %p85 = scmp.eq.s32.totalorder %s12, 1
      %p86 = scmp.ne.s32.totalorder %s81, %s83
      %p87 = scmp.eq.s32.totalorder %s12, 0
      %p88 = por %p86, %p87
      %p89 = scmp.ne.s32.totalorder %s81, %s83
      %p90 = scmp.eq.s32.totalorder %s17, 1
      %p91 = por %p89, %p90
      %p92 = scmp.ne.s32.totalorder %s83, %s84
      %p93 = scmp.eq.s32.totalorder %s17, 0
      %p94 = por %p92, %p93
      %p95 = scmp.ne.s32.totalorder %s83, %s84
      %p96 = scmp.eq.s32.totalorder %s18, 1
      %p97 = por %p95, %p96
      %p99 = scmp.ne.s32.totalorder %s84, %s98
      %p100 = scmp.eq.s32.totalorder %s18, 0
      %p101 = por %p99, %p100
      %s102 = ssub.s32 %s19, %s31
      %s103 = ssub.s32 %s20, %s27
      %s104 = sor.u32 %s102, %s103
      %p105 = scmp.eq.s32.totalorder %s104, 0
      %s107 = sadd.s32 %s106, 1
      %s108 = scalar_select %p105, %s106, %s107
      %p111 = pneg %p105
      %p112 = scmp.eq.s32.totalorder %s12, 1
      %p113 = por %p111, %p112
      %p114 = scmp.ne.s32.totalorder %s106, %s109
      %p115 = scmp.eq.s32.totalorder %s12, 0
      %p116 = por %p114, %p115
      %p117 = scmp.ne.s32.totalorder %s106, %s109
      %p118 = scmp.eq.s32.totalorder %s17, 1
      %p119 = por %p117, %p118
      %p120 = scmp.ne.s32.totalorder %s109, %s110
      %p121 = scmp.eq.s32.totalorder %s17, 0
      %p122 = por %p120, %p121
      %p123 = scmp.ne.s32.totalorder %s109, %s110
      %p124 = scmp.eq.s32.totalorder %s18, 1
      %p125 = por %p123, %p124
      %p127 = scmp.ne.s32.totalorder %s110, %s126
      %p128 = scmp.eq.s32.totalorder %s18, 0
      %p129 = por %p127, %p128
      %p130 = scmp.le.s32.totalorder 1, %s12
      %p131 = scmp.lt.s32.totalorder %s12, 3
      %p132 = pnand %p130, %p131
      %p133 = pneg %p132
      // Predicated region
      $region9: #{tpu_custom_call.1} parent=5 // pred_check
        _
      $region10: #{tpu_custom_call.1} parent=5 // pred_check_branch
        %135 = sbr.rel (%p132) target = $region12
      $region11: #{tpu_custom_call.1} parent=5 // pred_region
        %s136 = ssub.s32 %s12, 1
        // Predicated region
        $region13: #{tpu_custom_call.1} parent=11 // pred_check
          %p137 = pneg %p73
        $region14: #{tpu_custom_call.1} parent=11 // pred_check_branch
          %139 = sbr.rel (%p137) target = $region16
        $region15: #{tpu_custom_call.1} parent=11 // pred_region
          _
        $region16: #{tpu_custom_call.1} parent=11 // pred_fallthru
          _
        // Predicated region
        $region17: #{tpu_custom_call.1} parent=11 // pred_check
          %p140 = pneg %p94
        $region18: #{tpu_custom_call.1} parent=11 // pred_check_branch
          %142 = sbr.rel (%p140) target = $region20
        $region19: #{tpu_custom_call.1} parent=11 // pred_region
          _
        $region20: #{tpu_custom_call.1} parent=11 // pred_fallthru
          _
      $region12: #{tpu_custom_call.1} parent=5 // pred_fallthru
        _
      %p143 = scmp.lt.s32.totalorder %s12, 2
      // Predicated region
      $region21: #{tpu_custom_call.1} parent=5 // pred_check
        %p144 = pneg %p143
      $region22: #{tpu_custom_call.1} parent=5 // pred_check_branch
        %146 = sbr.rel (%p144) target = $region24
      $region23: #{tpu_custom_call.1} parent=5 // pred_region
        // Predicated region
        $region25: #{tpu_custom_call.1} parent=23 // pred_check
          %p147 = pneg %p46
        $region26: #{tpu_custom_call.1} parent=23 // pred_check_branch
          %149 = sbr.rel (%p147) target = $region28
        $region27: #{tpu_custom_call.1} parent=23 // pred_region
          %s150 = smul.u32 2, %s20
          %p151 = scmp.lt.s32.totalorder %s19, 1
          %s152 = scalar_select %p151, %s19, 1
          %p153 = scmp.lt.s32.totalorder %s150, 1
          %s154 = scalar_select %p153, %s150, 1
          %s155 = smul.addr %s152, 2
          %s156 = sadd.s32 %s154, %s155
          %s157 = smul.addr %s156, 4
          %s158 = scalar_lea.vmem %s0, %s157
          %s159 = smul.u32 2, %s20
        $region28: #{tpu_custom_call.1} parent=23 // pred_fallthru
          _
      $region24: #{tpu_custom_call.1} parent=5 // pred_fallthru
        _
      %p160 = scmp.le.s32.totalorder 1, %s12
      %p161 = scmp.lt.s32.totalorder %s12, 3
      %p162 = pnand %p160, %p161
      %p163 = pneg %p162
      // Predicated region
      $region29: #{tpu_custom_call.1} parent=5 // pred_check
        _
      $region30: #{tpu_custom_call.1} parent=5 // pred_check_branch
        %165 = sbr.rel (%p162) target = $region32
      $region31: #{tpu_custom_call.1} parent=5 // pred_region
        %s166 = ssub.s32 %s12, 1
        %s167 = smul.u32 2, %s22
        %p168 = scmp.lt.s32.totalorder %s21, 1
        %s169 = scalar_select %p168, %s21, 1
        %p170 = scmp.lt.s32.totalorder %s167, 1
        %s171 = scalar_select %p170, %s167, 1
        %s172 = smul.addr %s169, 2
        %s173 = sadd.s32 %s171, %s172
        %s174 = smul.addr %s173, 4
        %s175 = scalar_lea.vmem %s0, %s174
        %p176 = pneg %p52
        %p177 = pneg %p49
        %p178 = pneg %p73
        %p179 = pneg %p70
        %p180 = pneg %p94
        %p181 = pneg %p91
        %p182 = pneg %p122
        %p183 = pneg %p119
        %s184 = sand.u32 %s109, 1
        %s185 = scalar_lea.sflag [#allocation3], %s184
        %s186 = sand.u32 %s109, 1
        %s187 = smul.addr %s186, 64
        %s188 = scalar_lea.vmem [#allocation2], %s187
        %s189 = smul.u32 2, %s22
        %p190 = scmp.lt.s32.totalorder %s21, 1
        %s191 = scalar_select %p190, %s21, 1
        %p192 = scmp.lt.s32.totalorder %s189, 1
        %s193 = scalar_select %p192, %s189, 1
        %s194 = smul.addr %s191, 2
        %s195 = sadd.s32 %s193, %s194
        %s196 = smul.addr %s195, 4
        %s197 = scalar_lea.vmem %s0, %s196
        %s198 = smul.u32 2, %s22
        %s199 = smul.u32 2, %s22
        %v200 = vld [vmem:[%s1] sm:$0xff]
        %v201 = vld [vmem:[%s1 + $0x8] sm:$0xff]
        %v202 = vld [vmem:[%s1 + $0x10] sm:$0xff]
        %v203 = vld [vmem:[%s1 + $0x18] sm:$0xff]
        %v204 = vld [vmem:[%s197] sm:$0xff]
        %v205 = vld [vmem:[%s2] sm:$0xff]
        %v206 = vld [vmem:[%s2 + $0x8] sm:$0xff]
        %v207 = vld [vmem:[%s2 + $0x10] sm:$0xff]
        %v208 = vld [vmem:[%s2 + $0x18] sm:$0xff]
        %210 = vset.pattern.permute.xlu0 0
        %211 = vperm.xlu0 %210, %v205
        %v212 = vpop.permute.xlu0 %211
        %215 = vset.pattern.permute.xlu0 0
        %216 = vperm.xlu0 %215, %v206
        %v217 = vpop.permute.xlu0 %216
        %220 = vset.pattern.permute.xlu0 0
        %221 = vperm.xlu0 %220, %v207
        %v222 = vpop.permute.xlu0 %221
        %225 = vset.pattern.permute.xlu0 0
        %226 = vperm.xlu0 %225, %v208
        %v227 = vpop.permute.xlu0 %226
        %230 = vset.pattern.permute.xlu0 0
        %231 = vperm.xlu0 %230, %v200
        %v232 = vpop.permute.xlu0 %231
        %235 = vset.pattern.permute.xlu0 0
        %236 = vperm.xlu0 %235, %v201
        %v237 = vpop.permute.xlu0 %236
        %240 = vset.pattern.permute.xlu0 0
        %241 = vperm.xlu0 %240, %v202
        %v242 = vpop.permute.xlu0 %241
        %245 = vset.pattern.permute.xlu0 0
        %246 = vperm.xlu0 %245, %v203
        %v247 = vpop.permute.xlu0 %246
        %v250 = vlaneseq
        %v251 = vshrl.u32 %v250, 7
        %v252 = vsub.s32 0, %v251
        %v253 = vrot.slane %v204, %v252
        %v254 = vlaneseq
        %v255 = vshrl.u32 %v254, 7
        %v256 = vsub.s32 4, %v255
        %v257 = vrot.slane %v204, %v256
        %v260 = vlaneseq
        %v261 = vshrl.u32 %v260, 7
        %v262 = vsub.s32 0, %v261
        %v263 = vrot.slane %v253, %v262
        %v264 = vlaneseq
        %v265 = vshrl.u32 %v264, 7
        %v266 = vsub.s32 0, %v265
        %v267 = vrot.slane %v257, %v266
        %v268 = vmul.f32 %v232, %v263
        %v269 = vmul.f32 %v232, %v267
        %v270 = vmul.f32 %v237, %v263
        %v271 = vmul.f32 %v237, %v267
        %v272 = vmul.f32 %v242, %v263
        %v273 = vmul.f32 %v242, %v267
        %v274 = vmul.f32 %v247, %v263
        %v275 = vmul.f32 %v247, %v267
        %v276 = vadd.f32 %v212, %v268
        %v277 = vadd.f32 %v212, %v269
        %v278 = vadd.f32 %v217, %v270
        %v279 = vadd.f32 %v217, %v271
        %v280 = vadd.f32 %v222, %v272
        %v281 = vadd.f32 %v222, %v273
        %v282 = vadd.f32 %v227, %v274
        %v283 = vadd.f32 %v227, %v275
        %284 = vset.pattern.permute.xlu0 1
        %285 = vperm.xlu0 %284, %v200
        %v286 = vpop.permute.xlu0 %285
        %288 = vset.pattern.permute.xlu0 1
        %289 = vperm.xlu0 %288, %v201
        %v290 = vpop.permute.xlu0 %289
        %292 = vset.pattern.permute.xlu0 1
        %293 = vperm.xlu0 %292, %v202
        %v294 = vpop.permute.xlu0 %293
        %296 = vset.pattern.permute.xlu0 1
        %297 = vperm.xlu0 %296, %v203
        %v298 = vpop.permute.xlu0 %297
        %v300 = vlaneseq
        %v301 = vshrl.u32 %v300, 7
        %v302 = vsub.s32 1, %v301
        %v303 = vrot.slane %v204, %v302
        %v304 = vlaneseq
        %v305 = vshrl.u32 %v304, 7
        %v306 = vsub.s32 5, %v305
        %v307 = vrot.slane %v204, %v306
        %v310 = vlaneseq
        %v311 = vshrl.u32 %v310, 7
        %v312 = vsub.s32 1, %v311
        %v313 = vrot.slane %v303, %v312
        %v314 = vlaneseq
        %v315 = vshrl.u32 %v314, 7
        %v316 = vsub.s32 1, %v315
        %v317 = vrot.slane %v307, %v316
        %v318 = vmul.f32 %v286, %v313
        %v319 = vmul.f32 %v286, %v317
        %v320 = vmul.f32 %v290, %v313
        %v321 = vmul.f32 %v290, %v317
        %v322 = vmul.f32 %v294, %v313
        %v323 = vmul.f32 %v294, %v317
        %v324 = vmul.f32 %v298, %v313
        %v325 = vmul.f32 %v298, %v317
        %v326 = vadd.f32 %v276, %v318
        %v327 = vadd.f32 %v277, %v319
        %v328 = vadd.f32 %v278, %v320
        %v329 = vadd.f32 %v279, %v321
        %v330 = vadd.f32 %v280, %v322
        %v331 = vadd.f32 %v281, %v323
        %v332 = vadd.f32 %v282, %v324
        %v333 = vadd.f32 %v283, %v325
        %334 = vset.pattern.permute.xlu0 2
        %335 = vperm.xlu0 %334, %v200
        %v336 = vpop.permute.xlu0 %335
        %338 = vset.pattern.permute.xlu0 2
        %339 = vperm.xlu0 %338, %v201
        %v340 = vpop.permute.xlu0 %339
        %342 = vset.pattern.permute.xlu0 2
        %343 = vperm.xlu0 %342, %v202
        %v344 = vpop.permute.xlu0 %343
        %346 = vset.pattern.permute.xlu0 2
        %347 = vperm.xlu0 %346, %v203
        %v348 = vpop.permute.xlu0 %347
        %v350 = vlaneseq
        %v351 = vshrl.u32 %v350, 7
        %v352 = vsub.s32 2, %v351
        %v353 = vrot.slane %v204, %v352
        %v354 = vlaneseq
        %v355 = vshrl.u32 %v354, 7
        %v356 = vsub.s32 6, %v355
        %v357 = vrot.slane %v204, %v356
        %v360 = vlaneseq
        %v361 = vshrl.u32 %v360, 7
        %v362 = vsub.s32 2, %v361
        %v363 = vrot.slane %v353, %v362
        %v364 = vlaneseq
        %v365 = vshrl.u32 %v364, 7
        %v366 = vsub.s32 2, %v365
        %v367 = vrot.slane %v357, %v366
        %v368 = vmul.f32 %v336, %v363
        %v369 = vmul.f32 %v336, %v367
        %v370 = vmul.f32 %v340, %v363
        %v371 = vmul.f32 %v340, %v367
        %v372 = vmul.f32 %v344, %v363
        %v373 = vmul.f32 %v344, %v367
        %v374 = vmul.f32 %v348, %v363
        %v375 = vmul.f32 %v348, %v367
        %v376 = vadd.f32 %v326, %v368
        %v377 = vadd.f32 %v327, %v369
        %v378 = vadd.f32 %v328, %v370
        %v379 = vadd.f32 %v329, %v371
        %v380 = vadd.f32 %v330, %v372
        %v381 = vadd.f32 %v331, %v373
        %v382 = vadd.f32 %v332, %v374
        %v383 = vadd.f32 %v333, %v375
        %384 = vset.pattern.permute.xlu0 3
        %385 = vperm.xlu0 %384, %v200
        %v386 = vpop.permute.xlu0 %385
        %388 = vset.pattern.permute.xlu0 3
        %389 = vperm.xlu0 %388, %v201
        %v390 = vpop.permute.xlu0 %389
        %392 = vset.pattern.permute.xlu0 3
        %393 = vperm.xlu0 %392, %v202
        %v394 = vpop.permute.xlu0 %393
        %396 = vset.pattern.permute.xlu0 3
        %397 = vperm.xlu0 %396, %v203
        %v398 = vpop.permute.xlu0 %397
        %v400 = vlaneseq
        %v401 = vshrl.u32 %v400, 7
        %v402 = vsub.s32 3, %v401
        %v403 = vrot.slane %v204, %v402
        %v404 = vlaneseq
        %v405 = vshrl.u32 %v404, 7
        %v406 = vsub.s32 7, %v405
        %v407 = vrot.slane %v204, %v406
        %v410 = vlaneseq
        %v411 = vshrl.u32 %v410, 7
        %v412 = vsub.s32 3, %v411
        %v413 = vrot.slane %v403, %v412
        %v414 = vlaneseq
        %v415 = vshrl.u32 %v414, 7
        %v416 = vsub.s32 3, %v415
        %v417 = vrot.slane %v407, %v416
        %v418 = vmul.f32 %v386, %v413
        %v419 = vmul.f32 %v386, %v417
        %v420 = vmul.f32 %v390, %v413
        %v421 = vmul.f32 %v390, %v417
        %v422 = vmul.f32 %v394, %v413
        %v423 = vmul.f32 %v394, %v417
        %v424 = vmul.f32 %v398, %v413
        %v425 = vmul.f32 %v398, %v417
        %v426 = vadd.f32 %v376, %v418
        %v427 = vadd.f32 %v377, %v419
        %v428 = vadd.f32 %v378, %v420
        %v429 = vadd.f32 %v379, %v421
        %v430 = vadd.f32 %v380, %v422
        %v431 = vadd.f32 %v381, %v423
        %v432 = vadd.f32 %v382, %v424
        %v433 = vadd.f32 %v383, %v425
        %v434 = vmax.f32 %v426, 0.0
        %v435 = vmax.f32 %v427, 0.0
        %v436 = vmax.f32 %v428, 0.0
        %v437 = vmax.f32 %v429, 0.0
        %v438 = vmax.f32 %v430, 0.0
        %v439 = vmax.f32 %v431, 0.0
        %v440 = vmax.f32 %v432, 0.0
        %v441 = vmax.f32 %v433, 0.0
        %442 = vst [vmem:[%s188] sm:$0xff] %v434
        %443 = vst [vmem:[%s188 + $0x8] sm:$0xff] %v435
        %444 = vst [vmem:[%s188 + $0x10] sm:$0xff] %v436
        %445 = vst [vmem:[%s188 + $0x18] sm:$0xff] %v437
        %446 = vst [vmem:[%s188 + $0x20] sm:$0xff] %v438
        %447 = vst [vmem:[%s188 + $0x28] sm:$0xff] %v439
        %448 = vst [vmem:[%s188 + $0x30] sm:$0xff] %v440
        %449 = vst [vmem:[%s188 + $0x38] sm:$0xff] %v441
        %s450 = sand.u32 %s109, 1
        %s451 = scalar_lea.sflag [#allocation3], %s450
        %s452 = sand.u32 %s109, 1
        %s453 = smul.addr %s452, 64
        %s454 = scalar_lea.vmem [#allocation2], %s453
        // Predicated region
        $region33: #{tpu_custom_call.1} parent=31 // pred_check
          %p455 = pneg %p119
        $region34: #{tpu_custom_call.1} parent=31 // pred_check_branch
          %457 = sbr.rel (%p455) target = $region36
        $region35: #{tpu_custom_call.1} parent=31 // pred_region
          %s458 = smul.u32 2, %s22
          %s460 = ssub.s32 1024, 1024
          %461 = vsyncadd %s451, %s460
          %s462 = smul.addr %s21, 8
          %s463 = sadd.s32 %s458, %s462
          %s464 = smul.addr %s463, 128
          %s465 = scalar_lea.hbm %s3, %s464
          %s466 = sshll.u32 %s454, 4
          %s467 = int_to_ptr.vmem [resolvable:$true] %s466
          %472 = dma.vmem_to_hbm [thread:$0]  %s467, 1024, %s465, %s451, 256, 256, 16
        $region36: #{tpu_custom_call.1} parent=31 // pred_fallthru
          _
      $region32: #{tpu_custom_call.1} parent=5 // pred_fallthru
        _
      %p473 = scmp.le.s32.totalorder 2, %s12
      // Predicated region
      $region37: #{tpu_custom_call.1} parent=5 // pred_check
        %p474 = pneg %p473
      $region38: #{tpu_custom_call.1} parent=5 // pred_check_branch
        %476 = sbr.rel (%p474) target = $region40
      $region39: #{tpu_custom_call.1} parent=5 // pred_region
        %s477 = ssub.s32 %s12, 2
        // Predicated region
        $region41: #{tpu_custom_call.1} parent=39 // pred_check
          %p478 = pneg %p125
        $region42: #{tpu_custom_call.1} parent=39 // pred_check_branch
          %480 = sbr.rel (%p478) target = $region44
        $region43: #{tpu_custom_call.1} parent=39 // pred_region
          %s481 = sand.u32 %s110, 1
          %s482 = scalar_lea.sflag [#allocation3], %s481
          %s483 = sand.u32 %s110, 1
          %s484 = smul.addr %s483, 64
          %s485 = scalar_lea.vmem [#allocation2], %s484
          %486 = dma.done %s482, 1024
        $region44: #{tpu_custom_call.1} parent=39 // pred_fallthru
          _
      $region40: #{tpu_custom_call.1} parent=5 // pred_fallthru
        _
    $region6: #{tpu_custom_call.1} parent=1 // loop_footer
      %s16 = sadd.s32 1, %s12
    $region7: #{tpu_custom_call.1} parent=1 // loop_footer_branch
      %11 = sbr.rel target = $region3
    $region8: #{tpu_custom_call.1} parent=1 // loop_exit
      _
    %487 = vsyncpa [#allocation3], 1
    %s488 = scalar_lea.sflag [#allocation3], 1
    %489 = vsyncpa %s488, 1

</llo_original>
